<compile_context>
chip_gen: v7x
topology: tpu7x:2x2x1
jax: 0.10.0
libtpu: 0.0.40
codegen_flags: <defaults>
</compile_context>

<pallas_src>
import functools

import jax
import jax.numpy as jnp
from jax.experimental import pallas as pl
from jax.experimental.pallas import tpu as pltpu


def _conv3x3_flat_kernel(x_ref, w2_ref, y_ref, xpad_ref, p_ref, *, H, W):
    """3x3 same-padding conv for one image in flat-spatial layout.

    x_ref:    (Cin, S)            S = H*W (lanes = flat spatial)
    w2_ref:   (Cout, 9*Cin)       k = (dy*3 + dx)*Cin + ci
    y_ref:    (Cout, S)
    xpad_ref: (Cin, S + 2*(W+1))  VMEM scratch with zero halo built in
    p_ref:    (9*Cin, S)          VMEM scratch holding the im2col patches
    """
    Cin, S = x_ref.shape
    pad = W + 1

    # Zero halo strips + copy the image into the padded scratch (replaces the
    # old jnp.pad HBM round trip; covers the top/bottom out-of-image taps).
    xpad_ref[:, :pad] = jnp.zeros((Cin, pad), xpad_ref.dtype)
    xpad_ref[:, pad + S:] = jnp.zeros((Cin, pad), xpad_ref.dtype)
    xpad_ref[:, pad:pad + S] = x_ref[...]

    # Column coordinate of every flat-spatial position; used to zero the taps
    # that would read across the left/right image edge (row wrap in flat form).
    col = jax.lax.broadcasted_iota(jnp.int32, (1, S), 1) % W
    not_left_edge = col >= 1           # needed by dx = -1 taps
    not_right_edge = col <= W - 2      # needed by dx = +1 taps

    # im2col: 9 shifted copies of the image stacked along the K axis.
    for dy in range(3):
        for dx in range(3):
            off = (dy - 1) * W + (dx - 1)
            tap = xpad_ref[:, pad + off: pad + off + S]        # (Cin, S)
            if dx == 0:
                tap = jnp.where(not_left_edge, tap, 0.0)
            elif dx == 2:
                tap = jnp.where(not_right_edge, tap, 0.0)
            k = dy * 3 + dx
            p_ref[k * Cin:(k + 1) * Cin, :] = tap

    # Single MXU contraction: (Cout, 9*Cin) x (9*Cin, S) -> (Cout, S), f32 acc.
    y = jax.lax.dot_general(
        w2_ref[...], p_ref[...],
        dimension_numbers=(((1,), (0,)), ((), ())),
        preferred_element_type=jnp.float32,
    )
    y_ref[...] = y.astype(y_ref.dtype)


def downsample(x_nchw, w_oihw, factor):
    """Downsample forward: 3x3 conv (no bias) + PixelUnshuffle1D(factor).

    x: (B, Cin, H, W) NCHW, w: (Cout, Cin, 3, 3) OIHW (PyTorch convention).
    Returns (B, Cout*factor, H, W // factor).
    """
    B, Cin, H, W = x_nchw.shape
    Cout = w_oihw.shape[0]
    S = H * W
    Ws = W // factor
    dtype = x_nchw.dtype

    # Flat-spatial view of the input (lane axis becomes H*W). No NHWC transpose,
    # no padding materialised in HBM.
    x_flat = x_nchw.reshape(B, Cin, S)
    # (Cout, Cin, 3, 3) -> (Cout, 9*Cin) with k = (dy*3 + dx)*Cin + ci.
    w2 = jnp.transpose(w_oihw, (0, 2, 3, 1)).reshape(Cout, 9 * Cin)

    kernel = functools.partial(_conv3x3_flat_kernel, H=H, W=W)
    y_flat = pl.pallas_call(
        kernel,
        out_shape=jax.ShapeDtypeStruct((B, Cout, S), dtype),
        grid=(B,),
        in_specs=[
            pl.BlockSpec((pl.Squeezed(), Cin, S), lambda b: (b, 0, 0)),
            pl.BlockSpec((Cout, 9 * Cin), lambda b: (0, 0)),
        ],
        out_specs=pl.BlockSpec((pl.Squeezed(), Cout, S), lambda b: (b, 0, 0)),
        scratch_shapes=[
            pltpu.VMEM((Cin, S + 2 * (W + 1)), dtype),   # zero-halo'd image
            pltpu.VMEM((9 * Cin, S), dtype),             # im2col patches
        ],
        compiler_params=pltpu.CompilerParams(
            dimension_semantics=("parallel",)),
    )(x_flat, w2)

    # PixelUnshuffle1D fused into one reshape/transpose of the flat conv output:
    # flat conv index s = (h*Ws + ws)*factor + f, output channel = f*Cout + c.
    T = S // factor
    out = y_flat.reshape(B, Cout, T, factor)
    out = jnp.transpose(out, (0, 3, 1, 2))
    return out.reshape(B, Cout * factor, H, Ws)


def _reference(x_nchw, w_oihw, factor):
    """Pure-JAX reference: XLA conv + direct transcription of the PyTorch
    PixelUnshuffle1D (view -> permute(0,4,1,2,3) -> view)."""
    y = jax.lax.conv_general_dilated(
        x_nchw, w_oihw,
        window_strides=(1, 1), padding=((1, 1), (1, 1)),
        dimension_numbers=("NCHW", "OIHW", "NCHW"),
        precision=jax.lax.Precision.HIGHEST,
    )
    B, C, H, W = y.shape
    Ws = W // factor
    y = y.reshape(B, C, H, Ws, factor)
    y = jnp.transpose(y, (0, 4, 1, 2, 3))
    return y.reshape(B, C * factor, H, Ws)


if __name__ == "__main__":
    n_feat, factor = 4, 2
    B, H, W = 2, 16, 16

    key = jax.random.PRNGKey(0)
    kx, kw = jax.random.split(key)
    x = jax.random.normal(kx, (B, n_feat, H, W), dtype=jnp.float32)
    # Conv2d(n_feat, n_feat, 3) weight, PyTorch OIHW convention, no bias.
    w = (jax.random.normal(kw, (n_feat, n_feat, 3, 3), dtype=jnp.float32)
         * (1.0 / (n_feat * 9) ** 0.5))

    fwd = jax.jit(downsample, static_argnums=2)
    out = jax.block_until_ready(fwd(x, w, factor))
    ref = jax.block_until_ready(_reference(x, w, factor))

    assert out.shape == (B, n_feat * factor, H, W // factor), out.shape
    err = float(jnp.max(jnp.abs(out - ref)))
    assert jnp.allclose(out, ref, atol=1e-5, rtol=1e-5), f"mismatch, max|diff|={err}"
    print("KERNEL_OK")
</pallas_src>

<mosaic_0001>
module attributes {stable_mosaic.version = 11 : i64} {
  func.func @_conv3x3_flat_kernel(%arg0: i32, %arg1: memref<1x4x256xf32, #tpu.memory_space<vmem>>, %arg2: memref<4x36xf32, #tpu.memory_space<vmem>>, %arg3: memref<1x4x256xf32, #tpu.memory_space<vmem>>, %arg4: memref<4x290xf32, #tpu.memory_space<vmem>>, %arg5: memref<36x256xf32, #tpu.memory_space<vmem>>) attributes {dimension_semantics = [#tpu.dimension_semantics<parallel>], iteration_bounds = array<i64: 2>, scalar_prefetch = 0 : i64, scratch_operands = 2 : i64, tpu.core_type = #tpu.core_type<tc>, window_params = [{transform_indices = @transform_0, window_bounds = array<i64: 1, 4, 256>}, {pipeline_mode = #tpu.pipeline_mode<synchronous>, transform_indices = @transform_1, window_bounds = array<i64: 4, 36>}, {transform_indices = @transform_2, window_bounds = array<i64: 1, 4, 256>}]} {
    %cst = arith.constant 0.000000e+00 : f32
    %0 = vector.broadcast %cst : f32 to vector<4x17xf32>
    %c0 = arith.constant 0 : index
    %c0_0 = arith.constant 0 : index
    %1 = vector.load %arg4[%c0, %c0_0] : memref<4x290xf32, #tpu.memory_space<vmem>>, vector<4x17xf32>
    tpu.vector_store %arg4[%c0, %c0_0], %0 {strides = array<i32>} : memref<4x290xf32, #tpu.memory_space<vmem>>, vector<4x17xf32>,
    %cst_1 = arith.constant 0.000000e+00 : f32
    %2 = vector.broadcast %cst_1 : f32 to vector<4x17xf32>
    %c0_2 = arith.constant 0 : index
    %c273 = arith.constant 273 : index
    %3 = vector.load %arg4[%c0_2, %c273] : memref<4x290xf32, #tpu.memory_space<vmem>>, vector<4x17xf32>
    tpu.vector_store %arg4[%c0_2, %c273], %2 {strides = array<i32>} : memref<4x290xf32, #tpu.memory_space<vmem>>, vector<4x17xf32>,
    %c0_3 = arith.constant 0 : index
    %c0_4 = arith.constant 0 : index
    %c0_5 = arith.constant 0 : index
    %4 = vector.load %arg1[%c0_3, %c0_4, %c0_5] : memref<1x4x256xf32, #tpu.memory_space<vmem>>, vector<1x4x256xf32>
    %5 = vector.shape_cast %4 : vector<1x4x256xf32> to vector<4x256xf32>
    %c0_6 = arith.constant 0 : index
    %c17 = arith.constant 17 : index
    %6 = vector.load %arg4[%c0_6, %c17] : memref<4x290xf32, #tpu.memory_space<vmem>>, vector<4x256xf32>
    tpu.vector_store %arg4[%c0_6, %c17], %5 {strides = array<i32>} : memref<4x290xf32, #tpu.memory_space<vmem>>, vector<4x256xf32>,
    %7 = tpu.iota {dimensions = array<i32: 1>} : vector<1x256xi32>
    %c16_i32 = arith.constant 16 : i32
    %c0_i32 = arith.constant 0 : i32
    %8 = arith.cmpi eq, %c16_i32, %c0_i32 : i32
    %c1_i32 = arith.constant 1 : i32
    %9 = arith.select %8, %c1_i32, %c16_i32 : i32
    %10 = vector.broadcast %9 : i32 to vector<1x256xi32>
    %11 = arith.remsi %7, %10 : vector<1x256xi32>
    %c0_i32_7 = arith.constant 0 : i32
    %12 = vector.broadcast %c0_i32_7 : i32 to vector<1x256xi32>
    %13 = arith.cmpi ne, %11, %12 : vector<1x256xi32>
    %c0_i32_8 = arith.constant 0 : i32
    %14 = vector.broadcast %c0_i32_8 : i32 to vector<1x256xi32>
    %15 = arith.cmpi slt, %11, %14 : vector<1x256xi32>
    %c0_i32_9 = arith.constant 0 : i32
    %16 = arith.cmpi slt, %9, %c0_i32_9 : i32
    %17 = vector.broadcast %16 : i1 to vector<1x256xi1>
    %18 = vector.broadcast %17 : vector<1x256xi1> to vector<1x256xi1>
    %19 = arith.xori %15, %18 : vector<1x256xi1>
    %20 = arith.andi %19, %13 : vector<1x256xi1>
    %21 = vector.broadcast %9 : i32 to vector<1x256xi32>
    %22 = arith.addi %11, %21 : vector<1x256xi32>
    %23 = arith.select %20, %22, %11 : vector<1x256xi1>, vector<1x256xi32>
    %c1_i32_10 = arith.constant 1 : i32
    %24 = vector.broadcast %c1_i32_10 : i32 to vector<1x256xi32>
    %25 = arith.cmpi sge, %23, %24 : vector<1x256xi32>
    %c14_i32 = arith.constant 14 : i32
    %26 = vector.broadcast %c14_i32 : i32 to vector<1x256xi32>
    %27 = arith.cmpi sle, %23, %26 : vector<1x256xi32>
    %c0_11 = arith.constant 0 : index
    %c0_12 = arith.constant 0 : index
    %28 = vector.load %arg4[%c0_11, %c0_12] : memref<4x290xf32, #tpu.memory_space<vmem>>, vector<4x256xf32>
    %cst_13 = arith.constant 0.000000e+00 : f32
    %29 = vector.shape_cast %25 : vector<1x256xi1> to vector<1x256xi1>
    %30 = vector.broadcast %29 : vector<1x256xi1> to vector<4x256xi1>
    %31 = vector.broadcast %cst_13 : f32 to vector<4x256xf32>
    %32 = arith.select %30, %28, %31 : vector<4x256xi1>, vector<4x256xf32>
    %c0_14 = arith.constant 0 : index
    %c0_15 = arith.constant 0 : index
    %33 = vector.load %arg5[%c0_14, %c0_15] : memref<36x256xf32, #tpu.memory_space<vmem>>, vector<4x256xf32>
    tpu.vector_store %arg5[%c0_14, %c0_15], %32 {strides = array<i32>} : memref<36x256xf32, #tpu.memory_space<vmem>>, vector<4x256xf32>,
    %c0_16 = arith.constant 0 : index
    %c1 = arith.constant 1 : index
    %34 = vector.load %arg4[%c0_16, %c1] : memref<4x290xf32, #tpu.memory_space<vmem>>, vector<4x256xf32>
    %c4 = arith.constant 4 : index
    %c0_17 = arith.constant 0 : index
    %35 = vector.load %arg5[%c4, %c0_17] : memref<36x256xf32, #tpu.memory_space<vmem>>, vector<4x256xf32>
    tpu.vector_store %arg5[%c4, %c0_17], %34 {strides = array<i32>} : memref<36x256xf32, #tpu.memory_space<vmem>>, vector<4x256xf32>,
    %c0_18 = arith.constant 0 : index
    %c2 = arith.constant 2 : index
    %36 = vector.load %arg4[%c0_18, %c2] : memref<4x290xf32, #tpu.memory_space<vmem>>, vector<4x256xf32>
    %cst_19 = arith.constant 0.000000e+00 : f32
    %37 = vector.shape_cast %27 : vector<1x256xi1> to vector<1x256xi1>
    %38 = vector.broadcast %37 : vector<1x256xi1> to vector<4x256xi1>
    %39 = vector.broadcast %cst_19 : f32 to vector<4x256xf32>
    %40 = arith.select %38, %36, %39 : vector<4x256xi1>, vector<4x256xf32>
    %c8 = arith.constant 8 : index
    %c0_20 = arith.constant 0 : index
    %41 = vector.load %arg5[%c8, %c0_20] : memref<36x256xf32, #tpu.memory_space<vmem>>, vector<4x256xf32>
    tpu.vector_store %arg5[%c8, %c0_20], %40 {strides = array<i32>} : memref<36x256xf32, #tpu.memory_space<vmem>>, vector<4x256xf32>,
    %c0_21 = arith.constant 0 : index
    %c16 = arith.constant 16 : index
    %42 = vector.load %arg4[%c0_21, %c16] : memref<4x290xf32, #tpu.memory_space<vmem>>, vector<4x256xf32>
    %cst_22 = arith.constant 0.000000e+00 : f32
    %43 = vector.shape_cast %25 : vector<1x256xi1> to vector<1x256xi1>
    %44 = vector.broadcast %43 : vector<1x256xi1> to vector<4x256xi1>
    %45 = vector.broadcast %cst_22 : f32 to vector<4x256xf32>
    %46 = arith.select %44, %42, %45 : vector<4x256xi1>, vector<4x256xf32>
    %c12 = arith.constant 12 : index
    %c0_23 = arith.constant 0 : index
    %47 = vector.load %arg5[%c12, %c0_23] : memref<36x256xf32, #tpu.memory_space<vmem>>, vector<4x256xf32>
    tpu.vector_store %arg5[%c12, %c0_23], %46 {strides = array<i32>} : memref<36x256xf32, #tpu.memory_space<vmem>>, vector<4x256xf32>,
    %c0_24 = arith.constant 0 : index
    %c17_25 = arith.constant 17 : index
    %48 = vector.load %arg4[%c0_24, %c17_25] : memref<4x290xf32, #tpu.memory_space<vmem>>, vector<4x256xf32>
    %c16_26 = arith.constant 16 : index
    %c0_27 = arith.constant 0 : index
    %49 = vector.load %arg5[%c16_26, %c0_27] : memref<36x256xf32, #tpu.memory_space<vmem>>, vector<4x256xf32>
    tpu.vector_store %arg5[%c16_26, %c0_27], %48 {strides = array<i32>} : memref<36x256xf32, #tpu.memory_space<vmem>>, vector<4x256xf32>,
    %c0_28 = arith.constant 0 : index
    %c18 = arith.constant 18 : index
    %50 = vector.load %arg4[%c0_28, %c18] : memref<4x290xf32, #tpu.memory_space<vmem>>, vector<4x256xf32>
    %cst_29 = arith.constant 0.000000e+00 : f32
    %51 = vector.shape_cast %27 : vector<1x256xi1> to vector<1x256xi1>
    %52 = vector.broadcast %51 : vector<1x256xi1> to vector<4x256xi1>
    %53 = vector.broadcast %cst_29 : f32 to vector<4x256xf32>
    %54 = arith.select %52, %50, %53 : vector<4x256xi1>, vector<4x256xf32>
    %c20 = arith.constant 20 : index
    %c0_30 = arith.constant 0 : index
    %55 = vector.load %arg5[%c20, %c0_30] : memref<36x256xf32, #tpu.memory_space<vmem>>, vector<4x256xf32>
    tpu.vector_store %arg5[%c20, %c0_30], %54 {strides = array<i32>} : memref<36x256xf32, #tpu.memory_space<vmem>>, vector<4x256xf32>,
    %c0_31 = arith.constant 0 : index
    %c32 = arith.constant 32 : index
    %56 = vector.load %arg4[%c0_31, %c32] : memref<4x290xf32, #tpu.memory_space<vmem>>, vector<4x256xf32>
    %cst_32 = arith.constant 0.000000e+00 : f32
    %57 = vector.shape_cast %25 : vector<1x256xi1> to vector<1x256xi1>
    %58 = vector.broadcast %57 : vector<1x256xi1> to vector<4x256xi1>
    %59 = vector.broadcast %cst_32 : f32 to vector<4x256xf32>
    %60 = arith.select %58, %56, %59 : vector<4x256xi1>, vector<4x256xf32>
    %c24 = arith.constant 24 : index
    %c0_33 = arith.constant 0 : index
    %61 = vector.load %arg5[%c24, %c0_33] : memref<36x256xf32, #tpu.memory_space<vmem>>, vector<4x256xf32>
    tpu.vector_store %arg5[%c24, %c0_33], %60 {strides = array<i32>} : memref<36x256xf32, #tpu.memory_space<vmem>>, vector<4x256xf32>,
    %c0_34 = arith.constant 0 : index
    %c33 = arith.constant 33 : index
    %62 = vector.load %arg4[%c0_34, %c33] : memref<4x290xf32, #tpu.memory_space<vmem>>, vector<4x256xf32>
    %c28 = arith.constant 28 : index
    %c0_35 = arith.constant 0 : index
    %63 = vector.load %arg5[%c28, %c0_35] : memref<36x256xf32, #tpu.memory_space<vmem>>, vector<4x256xf32>
    tpu.vector_store %arg5[%c28, %c0_35], %62 {strides = array<i32>} : memref<36x256xf32, #tpu.memory_space<vmem>>, vector<4x256xf32>,
    %c0_36 = arith.constant 0 : index
    %c34 = arith.constant 34 : index
    %64 = vector.load %arg4[%c0_36, %c34] : memref<4x290xf32, #tpu.memory_space<vmem>>, vector<4x256xf32>
    %cst_37 = arith.constant 0.000000e+00 : f32
    %65 = vector.shape_cast %27 : vector<1x256xi1> to vector<1x256xi1>
    %66 = vector.broadcast %65 : vector<1x256xi1> to vector<4x256xi1>
    %67 = vector.broadcast %cst_37 : f32 to vector<4x256xf32>
    %68 = arith.select %66, %64, %67 : vector<4x256xi1>, vector<4x256xf32>
    %c32_38 = arith.constant 32 : index
    %c0_39 = arith.constant 0 : index
    %69 = vector.load %arg5[%c32_38, %c0_39] : memref<36x256xf32, #tpu.memory_space<vmem>>, vector<4x256xf32>
    tpu.vector_store %arg5[%c32_38, %c0_39], %68 {strides = array<i32>} : memref<36x256xf32, #tpu.memory_space<vmem>>, vector<4x256xf32>,
    %c0_40 = arith.constant 0 : index
    %c0_41 = arith.constant 0 : index
    %70 = vector.load %arg2[%c0_40, %c0_41] : memref<4x36xf32, #tpu.memory_space<vmem>>, vector<4x36xf32>
    %c0_42 = arith.constant 0 : index
    %c0_43 = arith.constant 0 : index
    %71 = vector.load %arg5[%c0_42, %c0_43] : memref<36x256xf32, #tpu.memory_space<vmem>>, vector<36x256xf32>
    %cst_44 = arith.constant dense<0.000000e+00> : vector<4x256xf32>
    %72 = tpu.matmul %70, %71, %cst_44 {dimension_numbers = #tpu.dot_dimension_numbers<[1], [0], [0], [1], [0, 0, 1, 1], [], []>} : vector<4x36xf32>, vector<36x256xf32>, vector<4x256xf32> -> vector<4x256xf32>
    %c0_45 = arith.constant 0 : index
    %c0_46 = arith.constant 0 : index
    %c0_47 = arith.constant 0 : index
    %73 = vector.load %arg3[%c0_45, %c0_46, %c0_47] : memref<1x4x256xf32, #tpu.memory_space<vmem>>, vector<1x4x256xf32>
    %74 = vector.shape_cast %73 : vector<1x4x256xf32> to vector<4x256xf32>
    %75 = vector.shape_cast %72 : vector<4x256xf32> to vector<1x4x256xf32>
    tpu.vector_store %arg3[%c0_45, %c0_46, %c0_47], %75 {strides = array<i32>} : memref<1x4x256xf32, #tpu.memory_space<vmem>>, vector<1x4x256xf32>,
    return
  }
  func.func @transform_0(%arg0: i32) -> (i32, i32, i32) {
    %c0_i32 = arith.constant 0 : i32
    %c0_i32_0 = arith.constant 0 : i32
    %c0_i32_1 = arith.constant 0 : i32
    return %arg0, %c0_i32, %c0_i32_0 : i32, i32, i32
  }
  func.func @transform_1(%arg0: i32) -> (i32, i32) {
    %c0_i32 = arith.constant 0 : i32
    %c0_i32_0 = arith.constant 0 : i32
    %c0_i32_1 = arith.constant 0 : i32
    return %c0_i32, %c0_i32_0 : i32, i32
  }
  func.func @transform_2(%arg0: i32) -> (i32, i32, i32) {
    %c0_i32 = arith.constant 0 : i32
    %c0_i32_0 = arith.constant 0 : i32
    %c0_i32_1 = arith.constant 0 : i32
    return %arg0, %c0_i32, %c0_i32_0 : i32, i32, i32
  }
}

</mosaic_0001>

<llo_original>
// kernel: downsample.1
$region0: #{downsample.1}
  #allocation0 [shape = 'u32[]', space=smem, size = 0x4, offset = 0x4, fixed_abs, tag = 'smem constant byte address 0x4 - core index']
  #allocation1 [shape = 'u32[144,128]{1,0:T(1,128)}', space=vmem, size = 0x12000, scoped, tag = 'internal scratch']
  #allocation2 [shape = 'f32[4,290]{1,0:T(4,128)}', space=vmem, size = 0x1800, scoped, tag = 'scratch operand']
  #allocation3 [shape = 'f32[36,256]{1,0:T(8,128)}', space=vmem, size = 0xa000, scoped, tag = 'scratch operand']
  %s0 = inlined_call_operand.vmem [shape: f32[2,4,256], index: 0, kind: input, shape index: {}]
  %s1 = inlined_call_operand.vmem [shape: f32[4,36], index: 1, kind: input, shape index: {}]
  %s2 = inlined_call_operand.vmem [shape: f32[2,4,256], index: 2, kind: output, shape index: {}]
  %s3 = sld [smem:[#allocation0]]
  $region41: #{downsample.1} parent=0
    _
  %s5 = ssub.s32 1, %s3
  %s6 = scalar_select 0, %s5, %s3
  loop: start=0, step=1, limit=4
  $region2: #{downsample.1} parent=0 // loop_pre_header
    _
  $region3: #{downsample.1} parent=0 // loop_header
    %s8 = sphi 0, %s12
    %p9 = scmp.ge.s32.totalorder %s8, 4
    %s18 = sphi 0, %s20
    %s21 = sphi 0, %s18
    %s22 = sphi 0, %s21
    %s38 = sphi 0, %s22
    %s42 = sphi 0, %s42
    %s44 = sphi 0, %s42
    %s45 = sphi 0, %s44
    %s59 = sphi 0, %s45
    %s65 = sphi 0, %s67
    %s68 = sphi 0, %s65
    %s69 = sphi 0, %s68
    %s85 = sphi 0, %s69
  $region4: #{downsample.1} parent=0 // loop_header_branch
    %11 = sbr.rel (%p9) target = $region8
  $region5: #{downsample.1} parent=0 // loop_body
    %s13 = ssub.s32 %s8, 1
    %s14 = ssub.s32 %s8, 2
    %s15 = sadd.s32 %s8, 1
    %s16 = ssub.s32 %s8, %s15
    %p17 = scmp.eq.s32.totalorder %s16, 0
    %s19 = sadd.s32 %s18, 1
    %s20 = scalar_select %p17, %s18, %s19
    %p23 = pneg %p17
    %p24 = scmp.eq.s32.totalorder %s8, 1
    %p25 = por %p23, %p24
    %p26 = scmp.ne.s32.totalorder %s18, %s21
    %p27 = scmp.eq.s32.totalorder %s8, 0
    %p28 = por %p26, %p27
    %p29 = scmp.ne.s32.totalorder %s18, %s21
    %p30 = scmp.eq.s32.totalorder %s13, 1
    %p31 = por %p29, %p30
    %p32 = scmp.ne.s32.totalorder %s21, %s22
    %p33 = scmp.eq.s32.totalorder %s13, 0
    %p34 = por %p32, %p33
    %p35 = scmp.ne.s32.totalorder %s21, %s22
    %p36 = scmp.eq.s32.totalorder %s14, 1
    %p37 = por %p35, %p36
    %p39 = scmp.ne.s32.totalorder %s22, %s38
    %p40 = scmp.eq.s32.totalorder %s14, 0
    %p41 = por %p39, %p40
    %s43 = sadd.s32 %s42, 1
    %p46 = scmp.eq.s32.totalorder %s8, 1
    %p47 = scmp.ne.s32.totalorder %s42, %s44
    %p48 = scmp.eq.s32.totalorder %s8, 0
    %p49 = por %p47, %p48
    %p50 = scmp.ne.s32.totalorder %s42, %s44
    %p51 = scmp.eq.s32.totalorder %s13, 1
    %p52 = por %p50, %p51
    %p53 = scmp.ne.s32.totalorder %s44, %s45
    %p54 = scmp.eq.s32.totalorder %s13, 0
    %p55 = por %p53, %p54
    %p56 = scmp.ne.s32.totalorder %s44, %s45
    %p57 = scmp.eq.s32.totalorder %s14, 1
    %p58 = por %p56, %p57
    %p60 = scmp.ne.s32.totalorder %s45, %s59
    %p61 = scmp.eq.s32.totalorder %s14, 0
    %p62 = por %p60, %p61
    %s63 = ssub.s32 %s8, %s15
    %p64 = scmp.eq.s32.totalorder %s63, 0
    %s66 = sadd.s32 %s65, 1
    %s67 = scalar_select %p64, %s65, %s66
    %p70 = pneg %p64
    %p71 = scmp.eq.s32.totalorder %s8, 1
    %p72 = por %p70, %p71
    %p73 = scmp.ne.s32.totalorder %s65, %s68
    %p74 = scmp.eq.s32.totalorder %s8, 0
    %p75 = por %p73, %p74
    %p76 = scmp.ne.s32.totalorder %s65, %s68
    %p77 = scmp.eq.s32.totalorder %s13, 1
    %p78 = por %p76, %p77
    %p79 = scmp.ne.s32.totalorder %s68, %s69
    %p80 = scmp.eq.s32.totalorder %s13, 0
    %p81 = por %p79, %p80
    %p82 = scmp.ne.s32.totalorder %s68, %s69
    %p83 = scmp.eq.s32.totalorder %s14, 1
    %p84 = por %p82, %p83
    %p86 = scmp.ne.s32.totalorder %s69, %s85
    %p87 = scmp.eq.s32.totalorder %s14, 0
    %p88 = por %p86, %p87
    %p89 = scmp.le.s32.totalorder 1, %s8
    %p90 = scmp.lt.s32.totalorder %s8, 3
    %p91 = pnand %p89, %p90
    %p92 = pneg %p91
    // Predicated region
    $region9: #{downsample.1} parent=5 // pred_check
      _
    $region10: #{downsample.1} parent=5 // pred_check_branch
      %94 = sbr.rel (%p91) target = $region12
    $region11: #{downsample.1} parent=5 // pred_region
      %s95 = ssub.s32 %s8, 1
      // Predicated region
      $region13: #{downsample.1} parent=11 // pred_check
        %p96 = pneg %p55
      $region14: #{downsample.1} parent=11 // pred_check_branch
        %98 = sbr.rel (%p96) target = $region16
      $region15: #{downsample.1} parent=11 // pred_region
        _
      $region16: #{downsample.1} parent=11 // pred_fallthru
        _
    $region12: #{downsample.1} parent=5 // pred_fallthru
      _
    %p99 = scmp.lt.s32.totalorder %s8, 2
    // Predicated region
    $region17: #{downsample.1} parent=5 // pred_check
      %p100 = pneg %p99
    $region18: #{downsample.1} parent=5 // pred_check_branch
      %102 = sbr.rel (%p100) target = $region20
    $region19: #{downsample.1} parent=5 // pred_region
      // Predicated region
      $region21: #{downsample.1} parent=19 // pred_check
        %p103 = pneg %p28
      $region22: #{downsample.1} parent=19 // pred_check_branch
        %105 = sbr.rel (%p103) target = $region24
      $region23: #{downsample.1} parent=19 // pred_region
        %p106 = scmp.lt.s32.totalorder %s8, 1
        %s107 = scalar_select %p106, %s8, 1
        %s108 = smul.addr %s107, 2
        %s109 = smul.addr %s108, 4
        %s110 = scalar_lea.vmem %s0, %s109
      $region24: #{downsample.1} parent=19 // pred_fallthru
        _
    $region20: #{downsample.1} parent=5 // pred_fallthru
      _
    %p111 = scmp.le.s32.totalorder 1, %s8
    %p112 = scmp.lt.s32.totalorder %s8, 3
    %p113 = pnand %p111, %p112
    %p114 = pneg %p113
    // Predicated region
    $region25: #{downsample.1} parent=5 // pred_check
      _
    $region26: #{downsample.1} parent=5 // pred_check_branch
      %116 = sbr.rel (%p113) target = $region28
    $region27: #{downsample.1} parent=5 // pred_region
      %s117 = ssub.s32 %s8, 1
      %p118 = scmp.lt.s32.totalorder %s13, 1
      %s119 = scalar_select %p118, %s13, 1
      %s120 = smul.addr %s119, 2
      %s121 = smul.addr %s120, 4
      %s122 = scalar_lea.vmem %s0, %s121
      %p123 = pneg %p34
      %p124 = pneg %p31
      %p125 = pneg %p55
      %p126 = pneg %p52
      %p127 = pneg %p81
      %p128 = pneg %p78
      %p129 = scmp.lt.s32.totalorder %s13, 1
      %s130 = scalar_select %p129, %s13, 1
      %s131 = smul.addr %s130, 2
      %s132 = smul.addr %s131, 4
      %s133 = scalar_lea.vmem %s2, %s132
      %p134 = scmp.lt.s32.totalorder %s13, 1
      %s135 = scalar_select %p134, %s13, 1
      %s136 = smul.addr %s135, 2
      %s137 = smul.addr %s136, 4
      %s138 = scalar_lea.vmem %s0, %s137
      %p139 = scmp.lt.s32.totalorder %s13, 1
      %s140 = scalar_select %p139, %s13, 1
      %s141 = smul.addr %s140, 2
      %s142 = smul.addr %s141, 4
      %s143 = scalar_lea.vmem %s2, %s142
      %vm144 = vcmask 134144
      %145 = vst.msk [vmem:[#allocation2] sm:$0xf] %vm144, 0.0
      %vm146 = vcmask 273544
      %147 = vst.msk [vmem:[#allocation2 + $0x8] sm:$0xf] %vm146, 0.0
      %v148 = vld [vmem:[%s138] sm:$0xff]
      %150 = vrot.lane.b32.xlu0 %v148, 17
      %v151 = vpop.permute.xlu0 %150
      %v152 = vrot.slane %v151, 4
      %vm153 = vcmask 138240
      %v154 = vsel %vm153, %v152, %v151
      %vm157 = vcmask 1043592
      %vm158 = vcmask 1047556
      %vm159 = vmor %vm158, %vm157
      %160 = vst.msk [vmem:[#allocation2] sm:$0xff] %vm159, %v154
      %161 = vst.msk [vmem:[#allocation2 + $0x8] sm:$0xf] %vm144, %v152
      %v162 = vlaneseq
      %v163 = vand.u32 %v162, 127
      %v164 = vadd.s32 %v163, 128
      %vm165 = vcmp.lt.s32.totalorder %v163, 0
      %v166 = vsub.s32 0, %v163
      %v167 = vsel %vm165, %v166, %v163
      %v168 = vshrl.u32 %v167, 4
      %v169 = vand.u32 %v167, 15
      %v170 = vsub.s32 0, %v169
      %v171 = vsel %vm165, %v170, %v169
      %vm172 = vcmp.lt.s32.totalorder %v164, 0
      %v173 = vsub.s32 0, %v164
      %v174 = vsel %vm172, %v173, %v164
      %v175 = vshrl.u32 %v174, 4
      %v176 = vand.u32 %v174, 15
      %v177 = vsub.s32 0, %v176
      %v178 = vsel %vm172, %v177, %v176
      %vm179 = vcmp.ne.s32.totalorder %v171, 0
      %vm180 = vcmp.ne.s32.totalorder %v178, 0
      %vm181 = vcmp.lt.s32.totalorder %v171, 0
      %vm182 = vcmp.lt.s32.totalorder %v178, 0
      %vm183 = vmand %vm181, %vm179
      %vm184 = vmand %vm182, %vm180
      %v185 = vadd.s32 %v171, 16
      %v186 = vadd.s32 %v178, 16
      %v187 = vsel %vm183, %v185, %v171
      %v188 = vsel %vm184, %v186, %v178
      %vm189 = vcmp.ge.s32.totalorder %v187, 1
      %vm190 = vcmp.ge.s32.totalorder %v188, 1
      %vm191 = vcmp.le.s32.totalorder %v187, 14
      %vm192 = vcmp.le.s32.totalorder %v188, 14
      %v193 = vld [vmem:[#allocation2] sm:$0xff]
      %v194 = vsel %vm189, 1, 0
      %v195 = vsel %vm190, 1, 0
      %vm196 = vcmp.eq.s32.totalorder %v194, 1
      %vm197 = vcmp.eq.s32.totalorder %v195, 1
      %v199 = vcombine.high %v193, %v193
      %v201 = vsel %vm196, %v193, 0.0
      %v202 = vsel %vm197, %v199, 0.0
      %203 = vst [vmem:[#allocation3] sm:$0xf] %v201
      %204 = vst [vmem:[#allocation3 + $0x8] sm:$0xf] %v202
      %v205 = vld [vmem:[#allocation2] sm:$0xff]
      %v206 = vld [vmem:[#allocation2 + $0x8] sm:$0xf]
      %v209 = vcombine.low %v205, %v205
      %v210 = vcombine.low %v206, %v206
      %211 = vrot.lane.b32.xlu0 %v209, 127
      %v212 = vpop.permute.xlu0 %211
      %213 = vrot.lane.b32.xlu0 %v205, 127
      %v214 = vpop.permute.xlu0 %213
      %215 = vrot.lane.b32.xlu0 %v210, 127
      %v216 = vpop.permute.xlu0 %215
      %vm217 = vcmask 1039360
      %v218 = vsel %vm217, %v212, %v214
      %v219 = vsel %vm217, %v214, %v216
      %222 = vst [vmem:[#allocation3] sm:$0xf0] %v218
      %223 = vst [vmem:[#allocation3 + $0x8] sm:$0xf0] %v219
      %v224 = vld [vmem:[#allocation2] sm:$0xff]
      %v225 = vld [vmem:[#allocation2 + $0x8] sm:$0xf]
      %v226 = vsel %vm191, 1, 0
      %v227 = vsel %vm192, 1, 0
      %vm228 = vcmp.eq.s32.totalorder %v226, 1
      %vm229 = vcmp.eq.s32.totalorder %v227, 1
      %v232 = vcombine.high %v224, %v224
      %233 = vrot.lane.b32.xlu0 %v224, 126
      %v234 = vpop.permute.xlu0 %233
      %235 = vrot.lane.b32.xlu0 %v232, 126
      %v236 = vpop.permute.xlu0 %235
      %237 = vrot.lane.b32.xlu0 %v225, 126
      %v238 = vpop.permute.xlu0 %237
      %vm239 = vcmask 1031168
      %v240 = vsel %vm239, %v234, %v236
      %v241 = vsel %vm239, %v236, %v238
      %v244 = vsel %vm228, %v240, 0.0
      %v245 = vsel %vm229, %v241, 0.0
      %246 = vst [vmem:[#allocation3 + $0x10] sm:$0xf] %v244
      %247 = vst [vmem:[#allocation3 + $0x18] sm:$0xf] %v245
      %v248 = vld [vmem:[#allocation2] sm:$0xff]
      %v249 = vld [vmem:[#allocation2 + $0x8] sm:$0xf]
      %v252 = vcombine.high %v248, %v248
      %253 = vrot.lane.b32.xlu0 %v248, 112
      %v254 = vpop.permute.xlu0 %253
      %255 = vrot.lane.b32.xlu0 %v252, 112
      %v256 = vpop.permute.xlu0 %255
      %257 = vrot.lane.b32.xlu0 %v249, 112
      %v258 = vpop.permute.xlu0 %257
      %vm259 = vcmask 916480
      %v260 = vsel %vm259, %v254, %v256
      %v261 = vsel %vm259, %v256, %v258
      %v264 = vsel %vm196, %v260, 0.0
      %v265 = vsel %vm197, %v261, 0.0
      %v268 = vrot.slane %v264, 4
      %v269 = vrot.slane %v265, 4
      %272 = vst [vmem:[#allocation3 + $0x10] sm:$0xf0] %v268
      %273 = vst [vmem:[#allocation3 + $0x18] sm:$0xf0] %v269
      %v274 = vld [vmem:[#allocation2] sm:$0xff]
      %v275 = vld [vmem:[#allocation2 + $0x8] sm:$0xf]
      %v278 = vcombine.high %v274, %v274
      %279 = vrot.lane.b32.xlu0 %v274, 111
      %v280 = vpop.permute.xlu0 %279
      %281 = vrot.lane.b32.xlu0 %v278, 111
      %v282 = vpop.permute.xlu0 %281
      %283 = vrot.lane.b32.xlu0 %v275, 111
      %v284 = vpop.permute.xlu0 %283
      %vm285 = vcmask 908288
      %v286 = vsel %vm285, %v280, %v282
      %v287 = vsel %vm285, %v282, %v284
      %290 = vst [vmem:[#allocation3 + $0x20] sm:$0xf] %v286
      %291 = vst [vmem:[#allocation3 + $0x28] sm:$0xf] %v287
      %v292 = vld [vmem:[#allocation2] sm:$0xff]
      %v293 = vld [vmem:[#allocation2 + $0x8] sm:$0xf]
      %v296 = vcombine.high %v292, %v292
      %297 = vrot.lane.b32.xlu0 %v292, 110
      %v298 = vpop.permute.xlu0 %297
      %299 = vrot.lane.b32.xlu0 %v296, 110
      %v300 = vpop.permute.xlu0 %299
      %301 = vrot.lane.b32.xlu0 %v293, 110
      %v302 = vpop.permute.xlu0 %301
      %vm303 = vcmask 900096
      %v304 = vsel %vm303, %v298, %v300
      %v305 = vsel %vm303, %v300, %v302
      %v308 = vsel %vm228, %v304, 0.0
      %v309 = vsel %vm229, %v305, 0.0
      %v312 = vrot.slane %v308, 4
      %v313 = vrot.slane %v309, 4
      %316 = vst [vmem:[#allocation3 + $0x20] sm:$0xf0] %v312
      %317 = vst [vmem:[#allocation3 + $0x28] sm:$0xf0] %v313
      %v318 = vld [vmem:[#allocation2] sm:$0xff]
      %v319 = vld [vmem:[#allocation2 + $0x8] sm:$0xf]
      %v322 = vcombine.high %v318, %v318
      %323 = vrot.lane.b32.xlu0 %v318, 96
      %v324 = vpop.permute.xlu0 %323
      %325 = vrot.lane.b32.xlu0 %v322, 96
      %v326 = vpop.permute.xlu0 %325
      %327 = vrot.lane.b32.xlu0 %v319, 96
      %v328 = vpop.permute.xlu0 %327
      %vm329 = vcmask 785408
      %v330 = vsel %vm329, %v324, %v326
      %v331 = vsel %vm329, %v326, %v328
      %v334 = vsel %vm196, %v330, 0.0
      %v335 = vsel %vm197, %v331, 0.0
      %336 = vst [vmem:[#allocation3 + $0x30] sm:$0xf] %v334
      %337 = vst [vmem:[#allocation3 + $0x38] sm:$0xf] %v335
      %v338 = vld [vmem:[#allocation2] sm:$0xff]
      %v339 = vld [vmem:[#allocation2 + $0x8] sm:$0xf]
      %v342 = vcombine.low %v338, %v338
      %v343 = vcombine.low %v339, %v339
      %344 = vrot.lane.b32.xlu0 %v342, 95
      %v345 = vpop.permute.xlu0 %344
      %346 = vrot.lane.b32.xlu0 %v338, 95
      %v347 = vpop.permute.xlu0 %346
      %348 = vrot.lane.b32.xlu0 %v343, 95
      %v349 = vpop.permute.xlu0 %348
      %vm350 = vcmask 777216
      %v351 = vsel %vm350, %v345, %v347
      %v352 = vsel %vm350, %v347, %v349
      %355 = vst [vmem:[#allocation3 + $0x30] sm:$0xf0] %v351
      %356 = vst [vmem:[#allocation3 + $0x38] sm:$0xf0] %v352
      %v357 = vld [vmem:[#allocation2] sm:$0xff]
      %v358 = vld [vmem:[#allocation2 + $0x8] sm:$0xf]
      %v361 = vcombine.high %v357, %v357
      %362 = vrot.lane.b32.xlu0 %v357, 94
      %v363 = vpop.permute.xlu0 %362
      %364 = vrot.lane.b32.xlu0 %v361, 94
      %v365 = vpop.permute.xlu0 %364
      %366 = vrot.lane.b32.xlu0 %v358, 94
      %v367 = vpop.permute.xlu0 %366
      %vm368 = vcmask 769024
      %v369 = vsel %vm368, %v363, %v365
      %v370 = vsel %vm368, %v365, %v367
      %v373 = vsel %vm228, %v369, 0.0
      %v374 = vsel %vm229, %v370, 0.0
      %375 = vst [vmem:[#allocation3 + $0x40] sm:$0xf] %v373
      %376 = vst [vmem:[#allocation3 + $0x48] sm:$0xf] %v374
      %v377 = vld [vmem:[%s1] sm:$0xf]
      %v378 = vld [vmem:[#allocation3] sm:$0xff]
      %v379 = vld [vmem:[#allocation3 + $0x8] sm:$0xff]
      %v380 = vld [vmem:[#allocation3 + $0x10] sm:$0xff]
      %v381 = vld [vmem:[#allocation3 + $0x18] sm:$0xff]
      %v382 = vld [vmem:[#allocation3 + $0x20] sm:$0xff]
      %v383 = vld [vmem:[#allocation3 + $0x28] sm:$0xff]
      %v384 = vld [vmem:[#allocation3 + $0x30] sm:$0xff]
      %v385 = vld [vmem:[#allocation3 + $0x38] sm:$0xff]
      %v386 = vld [vmem:[#allocation3 + $0x40] sm:$0xf]
      %v387 = vld [vmem:[#allocation3 + $0x48] sm:$0xf]
      %vm388 = vcmask 293888
      %v390 = vsel %vm388, %v377, 0
      %vm392 = vcmask 1043456
      %v394 = vsel %vm392, %v386, 0
      %v397 = vsel %vm392, %v387, 0
      %399 = vmatprep.subr.mxu0 %v379
      %400 = vmatpush1.msra.mxu0 %v378
      %401 = vmatprep.subr.mxu0 %v381
      %402 = vmatpush1.msra.mxu0 %v380
      %403 = vmatprep.subr.mxu0 %v383
      %404 = vmatpush1.msra.mxu0 %v382
      %405 = vmatprep.subr.mxu0 %v385
      %406 = vmatpush1.msra.mxu0 %v384
      %407 = vmatprep.subr.mxu0 %v397
      %408 = vmatpush1.msra.mxu0 %v394
      %409 = vmatprep.subr.mxu0 0.0
      %410 = vmatpush1.msra.mxu0 0.0
      %411 = vmatprep.subr.mxu0 0.0
      %412 = vmatpush1.msra.mxu0 0.0
      %413 = vmatprep.subr.mxu0 0.0
      %414 = vmatpush1.msra.mxu0 0.0
      %415 = vmatprep.subr.mxu0 0.0
      %416 = vmatpush1.msra.mxu0 0.0
      %417 = vmatprep.subr.mxu0 0.0
      %418 = vmatpush1.msra.mxu0 0.0
      %419 = vmatprep.subr.mxu0 0.0
      %420 = vmatpush1.msra.mxu0 0.0
      %421 = vmatprep.subr.mxu0 0.0
      %422 = vmatpush1.msra.mxu0 0.0
      %423 = vmatprep.subr.mxu0 0.0
      %424 = vmatpush1.msra.mxu0 0.0
      %425 = vmatprep.subr.mxu0 0.0
      %426 = vmatpush1.msra.mxu0 0.0
      %427 = vmatprep.subr.mxu0 0.0
      %428 = vmatpush1.msra.mxu0 0.0
      %429 = vmatprep.subr.mxu0 0.0
      %430 = vmatpush1.msra.mxu0 0.0
      %431 = vmatprep.subr.mxu0 0.0
      %432 = vmatpush1.msra.mxu0 0.0
      %433 = vmatprep.subr.mxu0 0.0
      %434 = vmatpush1.msra.mxu0 0.0
      %435 = vmatprep.subr.mxu0 0.0
      %436 = vmatpush1.msra.mxu0 0.0
      %437 = vmatprep.subr.mxu0 0.0
      %438 = vmatpush1.msra.mxu0 0.0
      %439 = vmatprep.subr.mxu0 0.0
      %440 = vmatpush1.msra.mxu0 0.0
      %441 = vmatprep.subr.mxu0 0.0
      %442 = vmatpush1.msra.mxu0 0.0
      %443 = vmatprep.subr.mxu0 0.0
      %444 = vmatpush1.msra.mxu0 0.0
      %445 = vmatprep.subr.mxu0 0.0
      %446 = vmatpush1.msra.mxu0 0.0
      %447 = vmatprep.subr.mxu0 0.0
      %448 = vmatpush1.msra.mxu0 0.0
      %449 = vmatprep.subr.mxu0 0.0
      %450 = vmatpush1.msra.mxu0 0.0
      %451 = vmatprep.subr.mxu0 0.0
      %452 = vmatpush1.msra.mxu0 0.0
      %453 = vmatprep.subr.mxu0 0.0
      %454 = vmatpush1.msra.mxu0 0.0
      %455 = vmatprep.subr.mxu0 0.0
      %456 = vmatpush1.msra.mxu0 0.0
      %457 = vmatprep.subr.mxu0 0.0
      %458 = vmatpush1.msra.mxu0 0.0
      %459 = vmatprep.subr.mxu0 0.0
      %460 = vmatpush1.msra.mxu0 0.0
      %461 = vmatprep.subr.mxu0 0.0
      %462 = vmatpush1.msra.mxu0 0.0
      %463 = vmatprep.mubr.f32.mxu0 0.0
      %464 = vmatmul.mubr.f32.gmra.mrb[0].mxu0 %v390
      %v465 = vpop.f32.mrb[0].mxu0
      %v466 = vadd.f32 0.0, %v465
      %v467 = vpop.f32.mrb[0].mxu0
      %v468 = vadd.f32 0.0, %v467
      %469 = vdwg.mxu0
      %v472 = vcombine.low %v466, %v468
      %474 = vst [vmem:[%s143] sm:$0xff] %v472
      %p475 = scmp.lt.s32.totalorder %s13, 1
      %s476 = scalar_select %p475, %s13, 1
      %s477 = smul.addr %s476, 2
      %s478 = smul.addr %s477, 4
      %s479 = scalar_lea.vmem %s2, %s478
      // Predicated region
      $region29: #{downsample.1} parent=27 // pred_check
        %p480 = pneg %p78
      $region30: #{downsample.1} parent=27 // pred_check_branch
        %482 = sbr.rel (%p480) target = $region32
      $region31: #{downsample.1} parent=27 // pred_region
        _
      $region32: #{downsample.1} parent=27 // pred_fallthru
        _
    $region28: #{downsample.1} parent=5 // pred_fallthru
      _
    %p483 = scmp.le.s32.totalorder 2, %s8
    // Predicated region
    $region33: #{downsample.1} parent=5 // pred_check
      %p484 = pneg %p483
    $region34: #{downsample.1} parent=5 // pred_check_branch
      %486 = sbr.rel (%p484) target = $region36
    $region35: #{downsample.1} parent=5 // pred_region
      %s487 = ssub.s32 %s8, 2
      // Predicated region
      $region37: #{downsample.1} parent=35 // pred_check
        %p488 = pneg %p84
      $region38: #{downsample.1} parent=35 // pred_check_branch
        %490 = sbr.rel (%p488) target = $region40
      $region39: #{downsample.1} parent=35 // pred_region
        %p491 = scmp.lt.s32.totalorder %s14, 1
        %s492 = scalar_select %p491, %s14, 1
        %s493 = smul.addr %s492, 2
        %s494 = smul.addr %s493, 4
        %s495 = scalar_lea.vmem %s2, %s494
      $region40: #{downsample.1} parent=35 // pred_fallthru
        _
    $region36: #{downsample.1} parent=5 // pred_fallthru
      _
  $region6: #{downsample.1} parent=0 // loop_footer
    %s12 = sadd.s32 1, %s8
  $region7: #{downsample.1} parent=0 // loop_footer_branch
    %7 = sbr.rel target = $region3
  $region8: #{downsample.1} parent=0 // loop_exit
    _

</llo_original>
